<compile_context>
chip_gen: v6e
topology: v6e:2x2x1
jax: 0.10.0
libtpu: 0.0.40
codegen_flags: <defaults>
</compile_context>

<pallas_src>
import functools

import jax
import jax.numpy as jnp
from jax import lax
from jax.experimental import pallas as pl
from jax.experimental.pallas import tpu as pltpu


def _round_up(x, m):
    return (x + m - 1) // m * m


def _chip_info():
    """Returns (physical VMEM bytes per TensorCore, TensorCores per chip)."""
    vmem_bytes = 128 * 1024 * 1024
    try:
        info = pltpu.get_tpu_info()
        v = getattr(info, "vmem_capacity_bytes", None)
        if v:
            vmem_bytes = int(v)
    except Exception:
        pass
    kind = ""
    try:
        kind = jax.devices()[0].device_kind.lower()
    except Exception:
        pass
    # v7x is the only dual-TensorCore chip; it also has 64 MiB VMEM per TC.
    num_tc = 2 if ("v7" in kind or "7x" in kind) else 1
    if num_tc == 2:
        vmem_bytes = min(vmem_bytes, 64 * 1024 * 1024)
    return vmem_bytes, num_tc


def _gelu_exact_f32(h):
    # Exact GELU (erf form), matching torch.nn.GELU default, computed in f32.
    return 0.5 * h * (1.0 + lax.erf(h * jnp.float32(0.7071067811865476)))


def _mlp_resident_kernel(x_ref, w1_ref, b1_ref, w2_ref, b2_ref, o_ref):
    # Weights are VMEM-resident (constant index maps); single fused pass per row tile.
    h = jnp.dot(x_ref[...], w1_ref[...], preferred_element_type=jnp.float32) + b1_ref[...]
    h = _gelu_exact_f32(h)
    # Dropout with p=0.0 is the identity -> no-op.
    out = jnp.dot(h.astype(w2_ref.dtype), w2_ref[...],
                  preferred_element_type=jnp.float32) + b2_ref[...]
    o_ref[...] = out.astype(o_ref.dtype)


def _mlp_stream_kernel(x_ref, w1_ref, b1_ref, w2_ref, b2_ref, o_ref, acc_ref):
    # Hidden dim streamed in chunks along grid axis 1 ("arbitrary").
    k = pl.program_id(1)

    @pl.when(k == 0)
    def _init():
        # Seed the accumulator with the fc2 bias -> finalize is a pure cast.
        acc_ref[...] = jnp.broadcast_to(b2_ref[...].astype(jnp.float32), acc_ref.shape)

    h = jnp.dot(x_ref[...], w1_ref[...], preferred_element_type=jnp.float32) + b1_ref[...]
    h = _gelu_exact_f32(h)
    acc_ref[...] += jnp.dot(h.astype(w2_ref.dtype), w2_ref[...],
                            preferred_element_type=jnp.float32)

    @pl.when(k == pl.num_programs(1) - 1)
    def _finalize():
        o_ref[...] = acc_ref[...].astype(o_ref.dtype)


@functools.partial(jax.jit, static_argnames=("tm", "th", "force_stream"))
def mlp_block(xs, w1, b1, w2, b2, *, tm=None, th=512, force_stream=False):
    """xs: (..., in_features). Returns (..., out_features)."""
    orig_shape = xs.shape
    in_features, hidden = w1.shape
    out_features = w2.shape[1]
    out_dtype = xs.dtype

    # Cast x to the weight dtype once in the wrapper (not per hidden chunk in-kernel).
    x2d = xs.reshape(-1, in_features)
    if x2d.dtype != w1.dtype:
        x2d = x2d.astype(w1.dtype)
    m = x2d.shape[0]

    vmem_bytes, num_tc = _chip_info()
    budget = int(vmem_bytes * 0.8)  # hard per-TC tiling budget (v7x ~51 MiB, v6e ~102 MiB)

    wsize = jnp.dtype(w1.dtype).itemsize
    xsize = jnp.dtype(x2d.dtype).itemsize
    osize = jnp.dtype(out_dtype).itemsize

    hidden_p = _round_up(hidden, 128)
    out_p = _round_up(out_features, 128)

    # Row-tile granularity: 16 for packed (bf16) sublanes, else 8.
    row_mult = 16 if wsize < 4 else 8

    # Default row tile per chip (streamed-weight roofline needs ~tm flops/weight byte).
    if tm is None:
        tm = 384 if num_tc > 1 else 512
    tm = max(row_mult, _round_up(tm, row_mult))

    m_full = _round_up(max(m, 1), row_mult)
    if num_tc > 1 and m_full > row_mult:
        # v7x megacore: let the row grid have >= 2 iterations so both TCs get work.
        tm_cap = max(row_mult, _round_up(pl.cdiv(m, 2), row_mult))
    else:
        tm_cap = m_full  # single TC: one full-height step, no pointless split
    tm_goal = min(tm, tm_cap)

    weight_bytes = (in_features * hidden_p + hidden_p + hidden_p * out_p + out_p) * wsize

    def resident_bytes(t):
        return (2 * weight_bytes                  # weights/biases (count 2 buffers)
                + 2 * t * in_features * xsize     # x tile, double-buffered
                + 2 * t * out_p * osize           # out tile, double-buffered
                + 2 * t * hidden_p * 4            # f32 h + GELU temporary
                + t * out_p * 4)                  # f32 matmul result before cast

    def stream_bytes(t, thc):
        return (2 * t * in_features * xsize
                + 2 * (in_features * thc + thc) * wsize
                + 2 * (thc * out_p + out_p) * wsize
                + 2 * t * out_p * osize
                + t * out_p * 4                   # f32 accumulator scratch
                + 2 * t * thc * 4)                # f32 h + GELU temporary

    def shrink_tm(t0, fits):
        t = t0
        while t > row_mult and not fits(t):
            t = max(row_mult, _round_up(t // 2, row_mult))
        return t

    use_resident = (not force_stream) and resident_bytes(row_mult) <= budget

    if use_resident:
        tm_eff = shrink_tm(tm_goal, lambda t: resident_bytes(t) <= budget)
        est = resident_bytes(tm_eff)
    else:
        th_eff = min(_round_up(th, 128), hidden_p)
        while th_eff > 128 and stream_bytes(row_mult, th_eff) > budget:
            th_eff = max(128, _round_up(th_eff // 2, 128))
        tm_eff = shrink_tm(tm_goal, lambda t: stream_bytes(t, th_eff) <= budget)
        est = stream_bytes(tm_eff, th_eff)
        hidden_p = _round_up(hidden, th_eff)

    # Zero-pad on the weight side only (mathematically a no-op: padded hidden columns give
    # h = gelu(0) = 0 -> contribute 0; padded output columns are 0 and sliced off).
    if hidden_p != hidden:
        w1 = jnp.pad(w1, ((0, 0), (0, hidden_p - hidden)))
        b1 = jnp.pad(b1, ((0, hidden_p - hidden),))
        w2 = jnp.pad(w2, ((0, hidden_p - hidden), (0, 0)))
    if out_p != out_features:
        w2 = jnp.pad(w2, ((0, 0), (0, out_p - out_features)))
        b2 = jnp.pad(b2, ((0, out_p - out_features),))
    b1_2d = b1.reshape(1, hidden_p)
    b2_2d = b2.reshape(1, out_p)

    m_pad = _round_up(max(m, 1), tm_eff)
    if m_pad != m:
        # NOTE: HBM copy of the activations; pick m a multiple of tm_eff to avoid it.
        x2d = jnp.pad(x2d, ((0, m_pad - m), (0, 0)))

    # Explicit VMEM limit from the actual footprint (+25% headroom), capped below physical.
    vmem_limit = int(min(int(vmem_bytes * 0.9),
                         max(32 * 1024 * 1024, est + est // 4)))

    if use_resident:
        out = pl.pallas_call(
            _mlp_resident_kernel,
            out_shape=jax.ShapeDtypeStruct((m_pad, out_p), out_dtype),
            grid_spec=pltpu.PrefetchScalarGridSpec(
                num_scalar_prefetch=0,
                grid=(m_pad // tm_eff,),
                in_specs=[
                    pl.BlockSpec((tm_eff, in_features), lambda i: (i, 0)),
                    # Constant index maps -> fetched once, VMEM-resident across all rows.
                    pl.BlockSpec((in_features, hidden_p), lambda i: (0, 0)),
                    pl.BlockSpec((1, hidden_p), lambda i: (0, 0)),
                    pl.BlockSpec((hidden_p, out_p), lambda i: (0, 0)),
                    pl.BlockSpec((1, out_p), lambda i: (0, 0)),
                ],
                out_specs=pl.BlockSpec((tm_eff, out_p), lambda i: (i, 0)),
            ),
            compiler_params=pltpu.CompilerParams(
                dimension_semantics=("parallel",),
                vmem_limit_bytes=vmem_limit,
            ),
        )(x2d, w1, b1_2d, w2, b2_2d)
    else:
        out = pl.pallas_call(
            _mlp_stream_kernel,
            out_shape=jax.ShapeDtypeStruct((m_pad, out_p), out_dtype),
            grid_spec=pltpu.PrefetchScalarGridSpec(
                num_scalar_prefetch=0,
                grid=(m_pad // tm_eff, hidden_p // th_eff),
                in_specs=[
                    pl.BlockSpec((tm_eff, in_features), lambda i, k: (i, 0)),
                    pl.BlockSpec((in_features, th_eff), lambda i, k: (0, k)),
                    pl.BlockSpec((1, th_eff), lambda i, k: (0, k)),
                    pl.BlockSpec((th_eff, out_p), lambda i, k: (k, 0)),
                    pl.BlockSpec((1, out_p), lambda i, k: (0, 0)),
                ],
                out_specs=pl.BlockSpec((tm_eff, out_p), lambda i, k: (i, 0)),
                scratch_shapes=[pltpu.VMEM((tm_eff, out_p), jnp.float32)],
            ),
            compiler_params=pltpu.CompilerParams(
                dimension_semantics=("parallel", "arbitrary"),
                vmem_limit_bytes=vmem_limit,
            ),
        )(x2d, w1, b1_2d, w2, b2_2d)

    out = out[:m, :out_features]
    return out.reshape(*orig_shape[:-1], out_features)


def init_mlp_params(key, in_features, hidden_features=None, out_features=None,
                    dtype=jnp.float32):
    """Deterministic init matching the module's parameter shapes.
    PyTorch Linear stores weight as (out, in); we store the transpose (in, out)."""
    hidden_features = hidden_features or in_features
    out_features = out_features or in_features
    k1, k2, k3, k4 = jax.random.split(key, 4)
    bound1 = 1.0 / jnp.sqrt(in_features)
    bound2 = 1.0 / jnp.sqrt(hidden_features)
    w1 = jax.random.uniform(k1, (in_features, hidden_features), dtype, -bound1, bound1)
    b1 = jax.random.uniform(k2, (hidden_features,), dtype, -bound1, bound1)
    w2 = jax.random.uniform(k3, (hidden_features, out_features), dtype, -bound2, bound2)
    b2 = jax.random.uniform(k4, (out_features,), dtype, -bound2, bound2)
    return w1, b1, w2, b2


def _ref_mlp(xs, w1, b1, w2, b2):
    h = xs @ w1 + b1
    h = 0.5 * h * (1.0 + lax.erf(h * 0.7071067811865476))
    return h @ w2 + b2


if __name__ == "__main__":
    key = jax.random.PRNGKey(0)
    k_x, k_p, k_x2, k_p2 = jax.random.split(key, 4)

    batch, seq, in_features, hidden_features = 2, 8, 32, 64
    out_features = in_features  # MlpBlock default: out_features = in_features

    xs = jax.random.normal(k_x, (batch, seq, in_features), dtype=jnp.float32)
    w1, b1, w2, b2 = init_mlp_params(k_p, in_features, hidden_features, out_features)

    # Weight-resident path (common case).
    out = mlp_block(xs, w1, b1, w2, b2)
    out = jax.block_until_ready(out)
    ref = _ref_mlp(xs, w1, b1, w2, b2)
    assert out.shape == (batch, seq, out_features)
    assert jnp.allclose(out, ref, atol=1e-5, rtol=1e-5), "resident path mismatch"

    # Hidden-chunk streaming fallback (forced; 2 hidden chunks of 128).
    in2, hid2, out2 = 32, 256, 32
    xs2 = jax.random.normal(k_x2, (batch, seq, in2), dtype=jnp.float32)
    w1b, b1b, w2b, b2b = init_mlp_params(k_p2, in2, hid2, out2)
    out_s = mlp_block(xs2, w1b, b1b, w2b, b2b, th=128, force_stream=True)
    out_s = jax.block_until_ready(out_s)
    ref2 = _ref_mlp(xs2, w1b, b1b, w2b, b2b)
    assert out_s.shape == (batch, seq, out2)
    assert jnp.allclose(out_s, ref2, atol=1e-5, rtol=1e-5), "streaming path mismatch"

    print("KERNEL_OK")
</pallas_src>

<mosaic_0001>
module attributes {stable_mosaic.version = 11 : i64} {
  func.func @_mlp_resident_kernel(%arg0: i32, %arg1: memref<16x32xf32, #tpu.memory_space<vmem>>, %arg2: memref<32x128xf32, #tpu.memory_space<vmem>>, %arg3: memref<1x128xf32, #tpu.memory_space<vmem>>, %arg4: memref<128x128xf32, #tpu.memory_space<vmem>>, %arg5: memref<1x128xf32, #tpu.memory_space<vmem>>, %arg6: memref<16x128xf32, #tpu.memory_space<vmem>>) attributes {dimension_semantics = [#tpu.dimension_semantics<parallel>], iteration_bounds = array<i64: 1>, scalar_prefetch = 0 : i64, scratch_operands = 0 : i64, tpu.core_type = #tpu.core_type<tc>, window_params = [{transform_indices = @transform_0, window_bounds = array<i64: 16, 32>}, {pipeline_mode = #tpu.pipeline_mode<synchronous>, transform_indices = @transform_1, window_bounds = array<i64: 32, 128>}, {pipeline_mode = #tpu.pipeline_mode<synchronous>, transform_indices = @transform_2, window_bounds = array<i64: 1, 128>}, {pipeline_mode = #tpu.pipeline_mode<synchronous>, transform_indices = @transform_3, window_bounds = array<i64: 128, 128>}, {pipeline_mode = #tpu.pipeline_mode<synchronous>, transform_indices = @transform_4, window_bounds = array<i64: 1, 128>}, {transform_indices = @transform_5, window_bounds = array<i64: 16, 128>}]} {
    %c0 = arith.constant 0 : index
    %c0_0 = arith.constant 0 : index
    %0 = vector.load %arg1[%c0, %c0_0] : memref<16x32xf32, #tpu.memory_space<vmem>>, vector<16x32xf32>
    %c0_1 = arith.constant 0 : index
    %c0_2 = arith.constant 0 : index
    %1 = vector.load %arg2[%c0_1, %c0_2] : memref<32x128xf32, #tpu.memory_space<vmem>>, vector<32x128xf32>
    %cst = arith.constant dense<0.000000e+00> : vector<16x128xf32>
    %2 = tpu.matmul %0, %1, %cst {dimension_numbers = #tpu.dot_dimension_numbers<[1], [0], [0], [1], [0, 0, 1, 1], [], []>} : vector<16x32xf32>, vector<32x128xf32>, vector<16x128xf32> -> vector<16x128xf32>
    %c0_3 = arith.constant 0 : index
    %c0_4 = arith.constant 0 : index
    %3 = vector.load %arg3[%c0_3, %c0_4] : memref<1x128xf32, #tpu.memory_space<vmem>>, vector<1x128xf32>
    %4 = vector.broadcast %3 : vector<1x128xf32> to vector<16x128xf32>
    %5 = arith.addf %2, %4 : vector<16x128xf32>
    %cst_5 = arith.constant 5.000000e-01 : f32
    %6 = vector.broadcast %cst_5 : f32 to vector<16x128xf32>
    %7 = arith.mulf %6, %5 : vector<16x128xf32>
    %cst_6 = arith.constant 0.707106769 : f32
    %8 = vector.broadcast %cst_6 : f32 to vector<16x128xf32>
    %9 = arith.mulf %5, %8 : vector<16x128xf32>
    %10 = math.erf %9 : vector<16x128xf32>
    %cst_7 = arith.constant 1.000000e+00 : f32
    %11 = vector.broadcast %cst_7 : f32 to vector<16x128xf32>
    %12 = arith.addf %11, %10 : vector<16x128xf32>
    %13 = arith.mulf %7, %12 : vector<16x128xf32>
    %c0_8 = arith.constant 0 : index
    %c0_9 = arith.constant 0 : index
    %14 = vector.load %arg4[%c0_8, %c0_9] : memref<128x128xf32, #tpu.memory_space<vmem>>, vector<128x128xf32>
    %cst_10 = arith.constant dense<0.000000e+00> : vector<16x128xf32>
    %15 = tpu.matmul %13, %14, %cst_10 {dimension_numbers = #tpu.dot_dimension_numbers<[1], [0], [0], [1], [0, 0, 1, 1], [], []>} : vector<16x128xf32>, vector<128x128xf32>, vector<16x128xf32> -> vector<16x128xf32>
    %c0_11 = arith.constant 0 : index
    %c0_12 = arith.constant 0 : index
    %16 = vector.load %arg5[%c0_11, %c0_12] : memref<1x128xf32, #tpu.memory_space<vmem>>, vector<1x128xf32>
    %17 = vector.broadcast %16 : vector<1x128xf32> to vector<16x128xf32>
    %18 = arith.addf %15, %17 : vector<16x128xf32>
    %c0_13 = arith.constant 0 : index
    %c0_14 = arith.constant 0 : index
    %19 = vector.load %arg6[%c0_13, %c0_14] : memref<16x128xf32, #tpu.memory_space<vmem>>, vector<16x128xf32>
    tpu.vector_store %arg6[%c0_13, %c0_14], %18 {strides = array<i32>} : memref<16x128xf32, #tpu.memory_space<vmem>>, vector<16x128xf32>,
    return
  }
  func.func @transform_0(%arg0: i32) -> (i32, i32) {
    %c0_i32 = arith.constant 0 : i32
    %c0_i32_0 = arith.constant 0 : i32
    return %arg0, %c0_i32 : i32, i32
  }
  func.func @transform_1(%arg0: i32) -> (i32, i32) {
    %c0_i32 = arith.constant 0 : i32
    %c0_i32_0 = arith.constant 0 : i32
    %c0_i32_1 = arith.constant 0 : i32
    return %c0_i32, %c0_i32_0 : i32, i32
  }
  func.func @transform_2(%arg0: i32) -> (i32, i32) {
    %c0_i32 = arith.constant 0 : i32
    %c0_i32_0 = arith.constant 0 : i32
    %c0_i32_1 = arith.constant 0 : i32
    return %c0_i32, %c0_i32_0 : i32, i32
  }
  func.func @transform_3(%arg0: i32) -> (i32, i32) {
    %c0_i32 = arith.constant 0 : i32
    %c0_i32_0 = arith.constant 0 : i32
    %c0_i32_1 = arith.constant 0 : i32
    return %c0_i32, %c0_i32_0 : i32, i32
  }
  func.func @transform_4(%arg0: i32) -> (i32, i32) {
    %c0_i32 = arith.constant 0 : i32
    %c0_i32_0 = arith.constant 0 : i32
    %c0_i32_1 = arith.constant 0 : i32
    return %c0_i32, %c0_i32_0 : i32, i32
  }
  func.func @transform_5(%arg0: i32) -> (i32, i32) {
    %c0_i32 = arith.constant 0 : i32
    %c0_i32_0 = arith.constant 0 : i32
    return %arg0, %c0_i32 : i32, i32
  }
}

</mosaic_0001>

<llo_original>
// kernel: mlp_block.1
$region0: #{mlp_block.1}
  #allocation0 [shape = 'u32[]', space=smem, size = 0x4, offset = 0x4, fixed_abs, tag = 'smem constant byte address 0x4 - core index']
  #allocation1 [shape = 'u32[144,128]{1,0:T(1,128)}', space=vmem, size = 0x12000, scoped, tag = 'internal scratch']
  %s0 = inlined_call_operand.vmem [shape: f32[16,32], index: 0, kind: input, shape index: {}]
  %s1 = inlined_call_operand.vmem [shape: f32[32,128], index: 1, kind: input, shape index: {}]
  %s2 = inlined_call_operand.vmem [shape: f32[1,128], index: 2, kind: input, shape index: {}]
  %s3 = inlined_call_operand.vmem [shape: f32[128,128], index: 3, kind: input, shape index: {}]
  %s4 = inlined_call_operand.vmem [shape: f32[1,128], index: 4, kind: input, shape index: {}]
  %s5 = inlined_call_operand.vmem [shape: f32[16,128], index: 5, kind: output, shape index: {}]
  %s6 = sld [smem:[#allocation0]]
  $region30: #{mlp_block.1} parent=0
    _
  %s8 = ssub.s32 1, %s6
  %s9 = scalar_select 0, %s8, %s6
  // Predicated region
  $region2: #{mlp_block.1} parent=0 // pred_check
    _
  $region3: #{mlp_block.1} parent=0 // pred_check_branch
    %11 = sbr.rel (0) target = $region5
  $region4: #{mlp_block.1} parent=0 // pred_region
    _
  $region5: #{mlp_block.1} parent=0 // pred_fallthru
    _
  // Predicated region
  $region6: #{mlp_block.1} parent=0 // pred_check
    _
  $region7: #{mlp_block.1} parent=0 // pred_check_branch
    %13 = sbr.rel (0) target = $region9
  $region8: #{mlp_block.1} parent=0 // pred_region
    _
  $region9: #{mlp_block.1} parent=0 // pred_fallthru
    _
  // Predicated region
  $region10: #{mlp_block.1} parent=0 // pred_check
    _
  $region11: #{mlp_block.1} parent=0 // pred_check_branch
    %15 = sbr.rel (0) target = $region13
  $region12: #{mlp_block.1} parent=0 // pred_region
    _
  $region13: #{mlp_block.1} parent=0 // pred_fallthru
    _
  // Predicated region
  $region14: #{mlp_block.1} parent=0 // pred_check
    _
  $region15: #{mlp_block.1} parent=0 // pred_check_branch
    %17 = sbr.rel (0) target = $region17
  $region16: #{mlp_block.1} parent=0 // pred_region
    _
  $region17: #{mlp_block.1} parent=0 // pred_fallthru
    _
  // Predicated region
  $region18: #{mlp_block.1} parent=0 // pred_check
    _
  $region19: #{mlp_block.1} parent=0 // pred_check_branch
    %19 = sbr.rel (0) target = $region21
  $region20: #{mlp_block.1} parent=0 // pred_region
    _
  $region21: #{mlp_block.1} parent=0 // pred_fallthru
    _
  %v20 = vld [vmem:[%s0] sm:$0xff]
  %v21 = vld [vmem:[%s0 + $0x8] sm:$0xff]
  %v22 = vld [vmem:[%s1] sm:$0xff]
  %v23 = vld [vmem:[%s1 + $0x8] sm:$0xff]
  %v24 = vld [vmem:[%s1 + $0x10] sm:$0xff]
  %v25 = vld [vmem:[%s1 + $0x18] sm:$0xff]
  %v26 = vld [vmem:[%s2] sm:$0x1]
  %v28 = vlaneseq
  %v29 = vshrl.u32 %v28, 7
  %v30 = vsub.s32 0, %v29
  %v31 = vrot.slane %v26, %v30
  %vm33 = vcmask 261120
  %v35 = vsel %vm33, %v20, 0
  %v38 = vsel %vm33, %v21, 0
  %40 = vmatprep.subr.mxu0 0.0
  %41 = vmatpush1.msra.mxu0 0.0
  %42 = vmatprep.subr.mxu0 0.0
  %43 = vmatpush1.msra.mxu0 0.0
  %44 = vmatprep.subr.mxu0 0.0
  %45 = vmatpush1.msra.mxu0 0.0
  %46 = vmatprep.subr.mxu0 0.0
  %47 = vmatpush1.msra.mxu0 0.0
  %48 = vmatprep.subr.mxu0 0.0
  %49 = vmatpush1.msra.mxu0 0.0
  %50 = vmatprep.subr.mxu0 0.0
  %51 = vmatpush1.msra.mxu0 0.0
  %52 = vmatprep.subr.mxu0 0.0
  %53 = vmatpush1.msra.mxu0 0.0
  %54 = vmatprep.subr.mxu0 0.0
  %55 = vmatpush1.msra.mxu0 0.0
  %56 = vmatprep.subr.mxu0 0.0
  %57 = vmatpush1.msra.mxu0 0.0
  %58 = vmatprep.subr.mxu0 0.0
  %59 = vmatpush1.msra.mxu0 0.0
  %60 = vmatprep.subr.mxu0 0.0
  %61 = vmatpush1.msra.mxu0 0.0
  %62 = vmatprep.subr.mxu0 0.0
  %63 = vmatpush1.msra.mxu0 0.0
  %64 = vmatprep.subr.mxu0 0.0
  %65 = vmatpush1.msra.mxu0 %v25
  %66 = vmatprep.subr.mxu0 0.0
  %67 = vmatpush1.msra.mxu0 %v24
  %68 = vmatprep.subr.mxu0 0.0
  %69 = vmatpush1.msra.mxu0 %v23
  %70 = vmatprep.subr.mxu0 0.0
  %71 = vmatpush1.msra.mxu0 %v22
  %72 = vmatprep.subr.mxu0 0.0
  %73 = vmatpush2.msra.mxu0 0.0
  %74 = vmatprep.subr.mxu0 0.0
  %75 = vmatpush2.msra.mxu0 0.0
  %76 = vmatprep.subr.mxu0 0.0
  %77 = vmatpush2.msra.mxu0 0.0
  %78 = vmatprep.subr.mxu0 0.0
  %79 = vmatpush2.msra.mxu0 0.0
  %80 = vmatprep.subr.mxu0 0.0
  %81 = vmatpush2.msra.mxu0 0.0
  %82 = vmatprep.subr.mxu0 0.0
  %83 = vmatpush2.msra.mxu0 0.0
  %84 = vmatprep.subr.mxu0 0.0
  %85 = vmatpush2.msra.mxu0 0.0
  %86 = vmatprep.subr.mxu0 0.0
  %87 = vmatpush2.msra.mxu0 0.0
  %88 = vmatprep.subr.mxu0 0.0
  %89 = vmatpush2.msra.mxu0 0.0
  %90 = vmatprep.subr.mxu0 0.0
  %91 = vmatpush2.msra.mxu0 0.0
  %92 = vmatprep.subr.mxu0 0.0
  %93 = vmatpush2.msra.mxu0 0.0
  %94 = vmatprep.subr.mxu0 0.0
  %95 = vmatpush2.msra.mxu0 0.0
  %96 = vmatprep.subr.mxu0 0.0
  %97 = vmatpush2.msra.mxu0 0.0
  %98 = vmatprep.subr.mxu0 0.0
  %99 = vmatpush2.msra.mxu0 0.0
  %100 = vmatprep.subr.mxu0 0.0
  %101 = vmatpush2.msra.mxu0 0.0
  %102 = vmatprep.subr.mxu0 0.0
  %103 = vmatpush2.msra.mxu0 0.0
  %104 = vmatprep.mubr.f32.mxu0 0.0
  %105 = vmatmul.mubr.f32.gmra.mxu0 %v35
  %v106 = vpop.f32.mrf.mxu0
  %v107 = vadd.f32 %v31, %v106
  %v108 = vpop.f32.mrf.mxu0
  %109 = vmatprep.mubr.f32.mxu0 0.0
  %110 = vmatmul.mubr.f32.gmra.mxu0 %v38
  %v111 = vpop.f32.mrf.mxu0
  %v112 = vadd.f32 %v31, %v111
  %v113 = vpop.f32.mrf.mxu0
  %114 = vdwg.mxu0
  %v115 = vmul.f32 %v107, 0.5
  %v116 = vmul.f32 %v112, 0.5
  %v117 = vmul.f32 %v107, 0.70710677
  %v118 = vmul.f32 %v112, 0.70710677
  %v119 = verf.f32.pop %v117
  %v120 = verf.f32.pop %v118
  %v121 = vadd.f32 %v119, 1.0
  %v122 = vadd.f32 %v120, 1.0
  %v123 = vmul.f32 %v115, %v121
  %v124 = vmul.f32 %v116, %v122
  %v125 = vld [vmem:[%s3] sm:$0xff]
  %v126 = vld [vmem:[%s3 + $0x8] sm:$0xff]
  %v127 = vld [vmem:[%s3 + $0x10] sm:$0xff]
  %v128 = vld [vmem:[%s3 + $0x18] sm:$0xff]
  %v129 = vld [vmem:[%s3 + $0x20] sm:$0xff]
  %v130 = vld [vmem:[%s3 + $0x28] sm:$0xff]
  %v131 = vld [vmem:[%s3 + $0x30] sm:$0xff]
  %v132 = vld [vmem:[%s3 + $0x38] sm:$0xff]
  %v133 = vld [vmem:[%s3 + $0x40] sm:$0xff]
  %v134 = vld [vmem:[%s3 + $0x48] sm:$0xff]
  %v135 = vld [vmem:[%s3 + $0x50] sm:$0xff]
  %v136 = vld [vmem:[%s3 + $0x58] sm:$0xff]
  %v137 = vld [vmem:[%s3 + $0x60] sm:$0xff]
  %v138 = vld [vmem:[%s3 + $0x68] sm:$0xff]
  %v139 = vld [vmem:[%s3 + $0x70] sm:$0xff]
  %v140 = vld [vmem:[%s3 + $0x78] sm:$0xff]
  %v141 = vld [vmem:[%s4] sm:$0x1]
  %v143 = vlaneseq
  %v144 = vshrl.u32 %v143, 7
  %v145 = vsub.s32 0, %v144
  %v146 = vrot.slane %v141, %v145
  %148 = vmatprep.subr.mxu0 0.0
  %149 = vmatpush1.msra.mxu0 %v140
  %150 = vmatprep.subr.mxu0 0.0
  %151 = vmatpush1.msra.mxu0 %v139
  %152 = vmatprep.subr.mxu0 0.0
  %153 = vmatpush1.msra.mxu0 %v138
  %154 = vmatprep.subr.mxu0 0.0
  %155 = vmatpush1.msra.mxu0 %v137
  %156 = vmatprep.subr.mxu0 0.0
  %157 = vmatpush1.msra.mxu0 %v136
  %158 = vmatprep.subr.mxu0 0.0
  %159 = vmatpush1.msra.mxu0 %v135
  %160 = vmatprep.subr.mxu0 0.0
  %161 = vmatpush1.msra.mxu0 %v134
  %162 = vmatprep.subr.mxu0 0.0
  %163 = vmatpush1.msra.mxu0 %v133
  %164 = vmatprep.subr.mxu0 0.0
  %165 = vmatpush1.msra.mxu0 %v132
  %166 = vmatprep.subr.mxu0 0.0
  %167 = vmatpush1.msra.mxu0 %v131
  %168 = vmatprep.subr.mxu0 0.0
  %169 = vmatpush1.msra.mxu0 %v130
  %170 = vmatprep.subr.mxu0 0.0
  %171 = vmatpush1.msra.mxu0 %v129
  %172 = vmatprep.subr.mxu0 0.0
  %173 = vmatpush1.msra.mxu0 %v128
  %174 = vmatprep.subr.mxu0 0.0
  %175 = vmatpush1.msra.mxu0 %v127
  %176 = vmatprep.subr.mxu0 0.0
  %177 = vmatpush1.msra.mxu0 %v126
  %178 = vmatprep.subr.mxu0 0.0
  %179 = vmatpush1.msra.mxu0 %v125
  %180 = vmatprep.subr.mxu0 0.0
  %181 = vmatpush2.msra.mxu0 0.0
  %182 = vmatprep.subr.mxu0 0.0
  %183 = vmatpush2.msra.mxu0 0.0
  %184 = vmatprep.subr.mxu0 0.0
  %185 = vmatpush2.msra.mxu0 0.0
  %186 = vmatprep.subr.mxu0 0.0
  %187 = vmatpush2.msra.mxu0 0.0
  %188 = vmatprep.subr.mxu0 0.0
  %189 = vmatpush2.msra.mxu0 0.0
  %190 = vmatprep.subr.mxu0 0.0
  %191 = vmatpush2.msra.mxu0 0.0
  %192 = vmatprep.subr.mxu0 0.0
  %193 = vmatpush2.msra.mxu0 0.0
  %194 = vmatprep.subr.mxu0 0.0
  %195 = vmatpush2.msra.mxu0 0.0
  %196 = vmatprep.subr.mxu0 0.0
  %197 = vmatpush2.msra.mxu0 0.0
  %198 = vmatprep.subr.mxu0 0.0
  %199 = vmatpush2.msra.mxu0 0.0
  %200 = vmatprep.subr.mxu0 0.0
  %201 = vmatpush2.msra.mxu0 0.0
  %202 = vmatprep.subr.mxu0 0.0
  %203 = vmatpush2.msra.mxu0 0.0
  %204 = vmatprep.subr.mxu0 0.0
  %205 = vmatpush2.msra.mxu0 0.0
  %206 = vmatprep.subr.mxu0 0.0
  %207 = vmatpush2.msra.mxu0 0.0
  %208 = vmatprep.subr.mxu0 0.0
  %209 = vmatpush2.msra.mxu0 0.0
  %210 = vmatprep.subr.mxu0 0.0
  %211 = vmatpush2.msra.mxu0 0.0
  %212 = vmatprep.mubr.f32.mxu0 0.0
  %213 = vmatmul.mubr.f32.gmra.mxu0 %v123
  %v214 = vpop.f32.mrf.mxu0
  %v215 = vadd.f32 %v146, %v214
  %v216 = vpop.f32.mrf.mxu0
  %217 = vmatprep.mubr.f32.mxu0 0.0
  %218 = vmatmul.mubr.f32.gmra.mxu0 %v124
  %v219 = vpop.f32.mrf.mxu0
  %v220 = vadd.f32 %v146, %v219
  %v221 = vpop.f32.mrf.mxu0
  %222 = vdwg.mxu0
  %223 = vst [vmem:[%s5] sm:$0xff] %v215
  %224 = vst [vmem:[%s5 + $0x8] sm:$0xff] %v220
  // Predicated region
  $region22: #{mlp_block.1} parent=0 // pred_check
    _
  $region23: #{mlp_block.1} parent=0 // pred_check_branch
    %226 = sbr.rel (0) target = $region25
  $region24: #{mlp_block.1} parent=0 // pred_region
    _
  $region25: #{mlp_block.1} parent=0 // pred_fallthru
    _
  // Predicated region
  $region26: #{mlp_block.1} parent=0 // pred_check
    _
  $region27: #{mlp_block.1} parent=0 // pred_check_branch
    %228 = sbr.rel (0) target = $region29
  $region28: #{mlp_block.1} parent=0 // pred_region
    _
  $region29: #{mlp_block.1} parent=0 // pred_fallthru
    _

</llo_original>
